<compile_context>
chip_gen: v5e
topology: v5e:2x2
jax: 0.10.0
libtpu: 0.0.40
codegen_flags: <defaults>
</compile_context>

<pallas_src>
import functools

import jax
import jax.numpy as jnp
import numpy as np
from jax import lax
from jax.experimental import pallas as pl
from jax.experimental.pallas import tpu as pltpu


def _lstm_kernel(x_ref, w_ref, b_ref, h_out_ref, h_scr, c_scr, *,
                 hidden_dim, seq_len, seq_chunk):
    """One grid step = one (batch_tile, seq_chunk) slab of the LSTM recurrence.

    x_ref:  (seq_chunk, B, D)  bf16
    w_ref:  (D + H, 4H)        bf16   fused [W_ih^T ; W_hh^T]
    b_ref:  (1, 4H)            f32    b_ih + b_hh
    h_out_ref: (B, H)          f32    last hidden state (written on final chunk)
    h_scr, c_scr: (B, H)       f32    state carried across seq chunks
    """
    s = pl.program_id(1)
    H = hidden_dim
    B = h_scr.shape[0]

    @pl.when(s == 0)
    def _init():
        h_scr[...] = jnp.zeros_like(h_scr)
        c_scr[...] = jnp.zeros_like(c_scr)

    # Loop invariants hoisted out of the time loop (JAX does not CSE broadcasts).
    w = w_ref[...]                                      # (D+H, 4H) bf16, stays in vregs
    bias = jnp.broadcast_to(b_ref[...], (B, 4 * H))     # (B, 4H) f32

    def step(t, carry):
        h, c = carry                                    # f32 register carries
        x_t = x_ref[t].astype(jnp.float32)              # (B, D)
        a = jnp.concatenate([x_t, h], axis=-1)          # (B, D+H) fused activation
        # Single bf16 MXU matmul per timestep, f32 accumulate.
        gates = jnp.dot(a.astype(jnp.bfloat16), w,
                        preferred_element_type=jnp.float32) + bias
        # Full-128-lane EUP passes; slice the results instead of activating 32-lane chunks.
        sig = jax.nn.sigmoid(gates)                     # (B, 4H)
        th = jnp.tanh(gates)                            # (B, 4H)
        i_g = sig[:, 0 * H:1 * H]
        f_g = sig[:, 1 * H:2 * H]
        o_g = sig[:, 3 * H:4 * H]
        g_g = th[:, 2 * H:3 * H]
        c_new = f_g * c + i_g * g_g
        h_new = o_g * jnp.tanh(c_new)
        return h_new, c_new

    carry0 = (h_scr[...], c_scr[...])
    if seq_len % seq_chunk == 0:
        # Static trip count: give the LLO scheduler visibility via unrolling.
        h_f, c_f = lax.fori_loop(0, seq_chunk, step, carry0,
                                 unroll=min(seq_chunk, 8))
    else:
        # Ragged last chunk: dynamic bound (padded x rows are never read).
        n = jnp.minimum(seq_chunk, seq_len - s * seq_chunk)
        h_f, c_f = lax.fori_loop(0, n, step, carry0)

    # Persist state across seq chunks (one store per chunk, not per step).
    h_scr[...] = h_f
    c_scr[...] = c_f

    @pl.when(s == pl.num_programs(1) - 1)
    def _final():
        h_out_ref[...] = h_f


def _pick_batch_tile(batch):
    if batch <= 128:
        return batch
    for bt in (128, 64, 32, 16, 8):
        if batch % bt == 0:
            return bt
    return batch


def lstm_net_forward(x, w_ih, w_hh, b_ih, b_hh, w_out, b_out, *,
                     seq_chunk=None, batch_tile=None):
    """x: (batch, seq, input_dim) f32. Returns y: (batch, output_dim) f32."""
    B, S, D = x.shape
    H = w_ih.shape[0] // 4
    O = w_out.shape[0]

    if seq_chunk is None:
        seq_chunk = min(S, 256)       # bigger chunks amortize per-grid-step overhead
    if batch_tile is None:
        batch_tile = _pick_batch_tile(B)

    # Layout prep (plain JAX glue):
    #  * x -> (seq, batch, D) bf16: each grid step DMAs a big contiguous slab.
    #  * fuse W_ih^T and W_hh^T into one (D+H, 4H) bf16 matmul operand.
    #  * fold both LSTM biases together; bias / state math stays f32.
    x_sbd = jnp.transpose(x, (1, 0, 2)).astype(jnp.bfloat16)
    w_fused = jnp.concatenate(
        [jnp.transpose(w_ih), jnp.transpose(w_hh)], axis=0).astype(jnp.bfloat16)
    b = (b_ih + b_hh).reshape(1, 4 * H).astype(jnp.float32)

    n_b = B // batch_tile
    n_s = pl.cdiv(S, seq_chunk)

    kernel = functools.partial(_lstm_kernel, hidden_dim=H,
                               seq_len=S, seq_chunk=seq_chunk)

    h_last = pl.pallas_call(
        kernel,
        out_shape=jax.ShapeDtypeStruct((B, H), jnp.float32),
        grid_spec=pltpu.PrefetchScalarGridSpec(
            num_scalar_prefetch=0,
            grid=(n_b, n_s),
            in_specs=[
                pl.BlockSpec((seq_chunk, batch_tile, D), lambda bi, si: (si, bi, 0)),
                pl.BlockSpec((D + H, 4 * H), lambda bi, si: (0, 0)),   # fused weights
                pl.BlockSpec((1, 4 * H), lambda bi, si: (0, 0)),       # fused bias
            ],
            out_specs=pl.BlockSpec((batch_tile, H), lambda bi, si: (bi, 0)),
            scratch_shapes=[
                pltpu.VMEM((batch_tile, H), jnp.float32),   # h carried across chunks
                pltpu.VMEM((batch_tile, H), jnp.float32),   # c carried across chunks
            ],
        ),
        compiler_params=pltpu.CompilerParams(
            # batch is embarrassingly parallel (v7x megacore); seq is the recurrence.
            dimension_semantics=("parallel", "arbitrary"),
            vmem_limit_bytes=32 * 1024 * 1024,
        ),
        # TODO(synk): at production H, single-buffer the invariant weight BlockSpecs
        # (pipeline_mode=pl.Buffered(1)) to fit v7x's 64 MiB VMEM.
    )(x_sbd, w_fused, b)

    # Final Linear kept in plain XLA: runs once, O=4 would otherwise force a masked
    # 4-lane store epilogue inside the kernel (v5e feedback).
    return h_last @ jnp.transpose(w_out) + b_out.reshape(1, O)


def _reference_forward(x, w_ih, w_hh, b_ih, b_hh, w_out, b_out):
    """Plain-JAX f32 reference mirroring torch.nn.LSTM(batch_first=True) + Linear."""
    B, S, D = x.shape
    H = w_hh.shape[1]

    def step(carry, x_t):
        h, c = carry
        gates = x_t @ w_ih.T + h @ w_hh.T + b_ih + b_hh
        i = jax.nn.sigmoid(gates[:, 0 * H:1 * H])
        f = jax.nn.sigmoid(gates[:, 1 * H:2 * H])
        g = jnp.tanh(gates[:, 2 * H:3 * H])
        o = jax.nn.sigmoid(gates[:, 3 * H:4 * H])
        c = f * c + i * g
        h = o * jnp.tanh(c)
        return (h, c), None

    h0 = jnp.zeros((B, H), jnp.float32)
    c0 = jnp.zeros((B, H), jnp.float32)
    (h_last, _), _ = jax.lax.scan(step, (h0, c0), jnp.transpose(x, (1, 0, 2)))
    return h_last @ w_out.T + b_out


def _orthogonal(key, shape):
    """Deterministic orthogonal-ish init (matches nn.init.orthogonal semantics)."""
    a = jax.random.normal(key, shape, dtype=jnp.float32)
    q, r = jnp.linalg.qr(a if shape[0] >= shape[1] else a.T)
    q = q * jnp.sign(jnp.diagonal(r))[None, :]
    return q if shape[0] >= shape[1] else q.T


if __name__ == "__main__":
    # Small shapes consistent with the module: x = (batch, seq, input_dim)
    batch, seq, input_dim, hidden_dim, output_dim = 8, 8, 16, 32, 4

    key = jax.random.PRNGKey(0)
    k_x, k_wih, k_whh, k_wout = jax.random.split(key, 4)

    x = jax.random.normal(k_x, (batch, seq, input_dim), dtype=jnp.float32)

    # nn.LSTM parameter shapes: weight_ih (4H, D), weight_hh (4H, H), biases (4H,)
    w_ih = _orthogonal(k_wih, (4 * hidden_dim, input_dim)).astype(jnp.float32)
    w_hh = _orthogonal(k_whh, (4 * hidden_dim, hidden_dim)).astype(jnp.float32)
    b_ih = jnp.zeros((4 * hidden_dim,), jnp.float32)   # nn.init.constant(bias, 0)
    b_hh = jnp.zeros((4 * hidden_dim,), jnp.float32)
    # nn.Linear(hidden_dim, output_dim): weight (O, H), bias (O,)
    w_out = _orthogonal(k_wout, (output_dim, hidden_dim)).astype(jnp.float32)
    b_out = jnp.zeros((output_dim,), jnp.float32)

    y = lstm_net_forward(x, w_ih, w_hh, b_ih, b_hh, w_out, b_out)
    y = jax.block_until_ready(y)

    # Reference is pure f32; kernel uses bf16 MXU matmuls (f32 accumulate), so the
    # tolerance reflects bf16 rounding accumulated over the recurrence.
    y_ref = _reference_forward(x, w_ih, w_hh, b_ih, b_hh, w_out, b_out)
    np.testing.assert_allclose(np.asarray(y), np.asarray(y_ref), rtol=5e-2, atol=5e-2)

    print("KERNEL_OK")
</pallas_src>

<mosaic_0001>
module attributes {stable_mosaic.version = 11 : i64} {
  func.func @_lstm_kernel(%arg0: i32, %arg1: i32, %arg2: memref<8x8x16xbf16, #tpu.memory_space<vmem>>, %arg3: memref<48x128xbf16, #tpu.memory_space<vmem>>, %arg4: memref<1x128xf32, #tpu.memory_space<vmem>>, %arg5: memref<8x32xf32, #tpu.memory_space<vmem>>, %arg6: memref<8x32xf32, #tpu.memory_space<vmem>>, %arg7: memref<8x32xf32, #tpu.memory_space<vmem>>) attributes {dimension_semantics = [#tpu.dimension_semantics<parallel>, #tpu.dimension_semantics<arbitrary>], iteration_bounds = array<i64: 1, 1>, scalar_prefetch = 0 : i64, scratch_operands = 2 : i64, tpu.core_type = #tpu.core_type<tc>, window_params = [{transform_indices = @transform_0, window_bounds = array<i64: 8, 8, 16>}, {pipeline_mode = #tpu.pipeline_mode<synchronous>, transform_indices = @transform_1, window_bounds = array<i64: 48, 128>}, {pipeline_mode = #tpu.pipeline_mode<synchronous>, transform_indices = @transform_2, window_bounds = array<i64: 1, 128>}, {transform_indices = @transform_3, window_bounds = array<i64: 8, 32>}]} {
    %c0_i32 = arith.constant 0 : i32
    %0 = arith.cmpi eq, %arg1, %c0_i32 : i32
    %1 = arith.extui %0 : i1 to i32
    %c0_i32_0 = arith.constant 0 : i32
    %2 = arith.cmpi ne, %1, %c0_i32_0 : i32
    scf.if %2 {
      %cst_46 = arith.constant 0.000000e+00 : f32
      %198 = vector.broadcast %cst_46 : f32 to vector<8x32xf32>
      %c0_47 = arith.constant 0 : index
      %c0_48 = arith.constant 0 : index
      %199 = vector.load %arg6[%c0_47, %c0_48] : memref<8x32xf32, #tpu.memory_space<vmem>>, vector<8x32xf32>
      tpu.vector_store %arg6[%c0_47, %c0_48], %198 {strides = array<i32>} : memref<8x32xf32, #tpu.memory_space<vmem>>, vector<8x32xf32>,
      %cst_49 = arith.constant 0.000000e+00 : f32
      %200 = vector.broadcast %cst_49 : f32 to vector<8x32xf32>
      %c0_50 = arith.constant 0 : index
      %c0_51 = arith.constant 0 : index
      %201 = vector.load %arg7[%c0_50, %c0_51] : memref<8x32xf32, #tpu.memory_space<vmem>>, vector<8x32xf32>
      tpu.vector_store %arg7[%c0_50, %c0_51], %200 {strides = array<i32>} : memref<8x32xf32, #tpu.memory_space<vmem>>, vector<8x32xf32>,
    } else {
    }
    %c0 = arith.constant 0 : index
    %c0_1 = arith.constant 0 : index
    %3 = vector.load %arg3[%c0, %c0_1] : memref<48x128xbf16, #tpu.memory_space<vmem>>, vector<48x128xbf16>
    %c0_2 = arith.constant 0 : index
    %c0_3 = arith.constant 0 : index
    %4 = vector.load %arg4[%c0_2, %c0_3] : memref<1x128xf32, #tpu.memory_space<vmem>>, vector<1x128xf32>
    %5 = vector.shape_cast %4 : vector<1x128xf32> to vector<1x128xf32>
    %6 = vector.broadcast %5 : vector<1x128xf32> to vector<8x128xf32>
    %c0_4 = arith.constant 0 : index
    %c0_5 = arith.constant 0 : index
    %7 = vector.load %arg6[%c0_4, %c0_5] : memref<8x32xf32, #tpu.memory_space<vmem>>, vector<8x32xf32>
    %c0_6 = arith.constant 0 : index
    %c0_7 = arith.constant 0 : index
    %8 = vector.load %arg7[%c0_6, %c0_7] : memref<8x32xf32, #tpu.memory_space<vmem>>, vector<8x32xf32>
    %c0_i32_8 = arith.constant 0 : i32
    %9 = arith.index_cast %c0_i32_8 : i32 to index
    %c0_9 = arith.constant 0 : index
    %c0_10 = arith.constant 0 : index
    %10 = vector.load %arg2[%9, %c0_9, %c0_10] : memref<8x8x16xbf16, #tpu.memory_space<vmem>>, vector<1x8x16xbf16>
    %11 = vector.shape_cast %10 : vector<1x8x16xbf16> to vector<8x16xbf16>
    %12 = arith.extf %11 : vector<8x16xbf16> to vector<8x16xf32>
    %13 = tpu.concatenate %12, %7 in 1 : vector<8x16xf32>, vector<8x32xf32> -> vector<8x48xf32>
    %14 = arith.truncf %13 : vector<8x48xf32> to vector<8x48xbf16>
    %cst = arith.constant dense<0.000000e+00> : vector<8x128xf32>
    %15 = tpu.matmul %14, %3, %cst {dimension_numbers = #tpu.dot_dimension_numbers<[1], [0], [0], [1], [0, 0, 1, 1], [], []>} : vector<8x48xbf16>, vector<48x128xbf16>, vector<8x128xf32> -> vector<8x128xf32>
    %16 = arith.addf %15, %6 : vector<8x128xf32>
    %17 = arith.negf %16 : vector<8x128xf32>
    %18 = math.exp %17 : vector<8x128xf32>
    %cst_11 = arith.constant 1.000000e+00 : f32
    %19 = vector.broadcast %cst_11 : f32 to vector<8x128xf32>
    %20 = arith.addf %19, %18 : vector<8x128xf32>
    %21 = arith.divf %19, %20 : vector<8x128xf32>
    %22 = math.tanh %16 : vector<8x128xf32>
    %23 = vector.extract_strided_slice %21 {offsets = [0, 0], sizes = [8, 32], strides = [1, 1]} : vector<8x128xf32> to vector<8x32xf32>
    %24 = vector.extract_strided_slice %21 {offsets = [0, 32], sizes = [8, 32], strides = [1, 1]} : vector<8x128xf32> to vector<8x32xf32>
    %25 = vector.extract_strided_slice %21 {offsets = [0, 96], sizes = [8, 32], strides = [1, 1]} : vector<8x128xf32> to vector<8x32xf32>
    %26 = vector.extract_strided_slice %22 {offsets = [0, 64], sizes = [8, 32], strides = [1, 1]} : vector<8x128xf32> to vector<8x32xf32>
    %27 = arith.mulf %24, %8 : vector<8x32xf32>
    %28 = arith.mulf %23, %26 : vector<8x32xf32>
    %29 = arith.addf %27, %28 : vector<8x32xf32>
    %30 = math.tanh %29 : vector<8x32xf32>
    %31 = arith.mulf %25, %30 : vector<8x32xf32>
    %c1_i32 = arith.constant 1 : i32
    %32 = arith.index_cast %c1_i32 : i32 to index
    %c0_12 = arith.constant 0 : index
    %c0_13 = arith.constant 0 : index
    %33 = vector.load %arg2[%32, %c0_12, %c0_13] : memref<8x8x16xbf16, #tpu.memory_space<vmem>>, vector<1x8x16xbf16>
    %34 = vector.shape_cast %33 : vector<1x8x16xbf16> to vector<8x16xbf16>
    %35 = arith.extf %34 : vector<8x16xbf16> to vector<8x16xf32>
    %36 = tpu.concatenate %35, %31 in 1 : vector<8x16xf32>, vector<8x32xf32> -> vector<8x48xf32>
    %37 = arith.truncf %36 : vector<8x48xf32> to vector<8x48xbf16>
    %cst_14 = arith.constant dense<0.000000e+00> : vector<8x128xf32>
    %38 = tpu.matmul %37, %3, %cst_14 {dimension_numbers = #tpu.dot_dimension_numbers<[1], [0], [0], [1], [0, 0, 1, 1], [], []>} : vector<8x48xbf16>, vector<48x128xbf16>, vector<8x128xf32> -> vector<8x128xf32>
    %39 = arith.addf %38, %6 : vector<8x128xf32>
    %40 = arith.negf %39 : vector<8x128xf32>
    %41 = math.exp %40 : vector<8x128xf32>
    %cst_15 = arith.constant 1.000000e+00 : f32
    %42 = vector.broadcast %cst_15 : f32 to vector<8x128xf32>
    %43 = arith.addf %42, %41 : vector<8x128xf32>
    %44 = arith.divf %42, %43 : vector<8x128xf32>
    %45 = math.tanh %39 : vector<8x128xf32>
    %46 = vector.extract_strided_slice %44 {offsets = [0, 0], sizes = [8, 32], strides = [1, 1]} : vector<8x128xf32> to vector<8x32xf32>
    %47 = vector.extract_strided_slice %44 {offsets = [0, 32], sizes = [8, 32], strides = [1, 1]} : vector<8x128xf32> to vector<8x32xf32>
    %48 = vector.extract_strided_slice %44 {offsets = [0, 96], sizes = [8, 32], strides = [1, 1]} : vector<8x128xf32> to vector<8x32xf32>
    %49 = vector.extract_strided_slice %45 {offsets = [0, 64], sizes = [8, 32], strides = [1, 1]} : vector<8x128xf32> to vector<8x32xf32>
    %50 = arith.mulf %47, %29 : vector<8x32xf32>
    %51 = arith.mulf %46, %49 : vector<8x32xf32>
    %52 = arith.addf %50, %51 : vector<8x32xf32>
    %53 = math.tanh %52 : vector<8x32xf32>
    %54 = arith.mulf %48, %53 : vector<8x32xf32>
    %c2_i32 = arith.constant 2 : i32
    %55 = arith.index_cast %c2_i32 : i32 to index
    %c0_16 = arith.constant 0 : index
    %c0_17 = arith.constant 0 : index
    %56 = vector.load %arg2[%55, %c0_16, %c0_17] : memref<8x8x16xbf16, #tpu.memory_space<vmem>>, vector<1x8x16xbf16>
    %57 = vector.shape_cast %56 : vector<1x8x16xbf16> to vector<8x16xbf16>
    %58 = arith.extf %57 : vector<8x16xbf16> to vector<8x16xf32>
    %59 = tpu.concatenate %58, %54 in 1 : vector<8x16xf32>, vector<8x32xf32> -> vector<8x48xf32>
    %60 = arith.truncf %59 : vector<8x48xf32> to vector<8x48xbf16>
    %cst_18 = arith.constant dense<0.000000e+00> : vector<8x128xf32>
    %61 = tpu.matmul %60, %3, %cst_18 {dimension_numbers = #tpu.dot_dimension_numbers<[1], [0], [0], [1], [0, 0, 1, 1], [], []>} : vector<8x48xbf16>, vector<48x128xbf16>, vector<8x128xf32> -> vector<8x128xf32>
    %62 = arith.addf %61, %6 : vector<8x128xf32>
    %63 = arith.negf %62 : vector<8x128xf32>
    %64 = math.exp %63 : vector<8x128xf32>
    %cst_19 = arith.constant 1.000000e+00 : f32
    %65 = vector.broadcast %cst_19 : f32 to vector<8x128xf32>
    %66 = arith.addf %65, %64 : vector<8x128xf32>
    %67 = arith.divf %65, %66 : vector<8x128xf32>
    %68 = math.tanh %62 : vector<8x128xf32>
    %69 = vector.extract_strided_slice %67 {offsets = [0, 0], sizes = [8, 32], strides = [1, 1]} : vector<8x128xf32> to vector<8x32xf32>
    %70 = vector.extract_strided_slice %67 {offsets = [0, 32], sizes = [8, 32], strides = [1, 1]} : vector<8x128xf32> to vector<8x32xf32>
    %71 = vector.extract_strided_slice %67 {offsets = [0, 96], sizes = [8, 32], strides = [1, 1]} : vector<8x128xf32> to vector<8x32xf32>
    %72 = vector.extract_strided_slice %68 {offsets = [0, 64], sizes = [8, 32], strides = [1, 1]} : vector<8x128xf32> to vector<8x32xf32>
    %73 = arith.mulf %70, %52 : vector<8x32xf32>
    %74 = arith.mulf %69, %72 : vector<8x32xf32>
    %75 = arith.addf %73, %74 : vector<8x32xf32>
    %76 = math.tanh %75 : vector<8x32xf32>
    %77 = arith.mulf %71, %76 : vector<8x32xf32>
    %c3_i32 = arith.constant 3 : i32
    %78 = arith.index_cast %c3_i32 : i32 to index
    %c0_20 = arith.constant 0 : index
    %c0_21 = arith.constant 0 : index
    %79 = vector.load %arg2[%78, %c0_20, %c0_21] : memref<8x8x16xbf16, #tpu.memory_space<vmem>>, vector<1x8x16xbf16>
    %80 = vector.shape_cast %79 : vector<1x8x16xbf16> to vector<8x16xbf16>
    %81 = arith.extf %80 : vector<8x16xbf16> to vector<8x16xf32>
    %82 = tpu.concatenate %81, %77 in 1 : vector<8x16xf32>, vector<8x32xf32> -> vector<8x48xf32>
    %83 = arith.truncf %82 : vector<8x48xf32> to vector<8x48xbf16>
    %cst_22 = arith.constant dense<0.000000e+00> : vector<8x128xf32>
    %84 = tpu.matmul %83, %3, %cst_22 {dimension_numbers = #tpu.dot_dimension_numbers<[1], [0], [0], [1], [0, 0, 1, 1], [], []>} : vector<8x48xbf16>, vector<48x128xbf16>, vector<8x128xf32> -> vector<8x128xf32>
    %85 = arith.addf %84, %6 : vector<8x128xf32>
    %86 = arith.negf %85 : vector<8x128xf32>
    %87 = math.exp %86 : vector<8x128xf32>
    %cst_23 = arith.constant 1.000000e+00 : f32
    %88 = vector.broadcast %cst_23 : f32 to vector<8x128xf32>
    %89 = arith.addf %88, %87 : vector<8x128xf32>
    %90 = arith.divf %88, %89 : vector<8x128xf32>
    %91 = math.tanh %85 : vector<8x128xf32>
    %92 = vector.extract_strided_slice %90 {offsets = [0, 0], sizes = [8, 32], strides = [1, 1]} : vector<8x128xf32> to vector<8x32xf32>
    %93 = vector.extract_strided_slice %90 {offsets = [0, 32], sizes = [8, 32], strides = [1, 1]} : vector<8x128xf32> to vector<8x32xf32>
    %94 = vector.extract_strided_slice %90 {offsets = [0, 96], sizes = [8, 32], strides = [1, 1]} : vector<8x128xf32> to vector<8x32xf32>
    %95 = vector.extract_strided_slice %91 {offsets = [0, 64], sizes = [8, 32], strides = [1, 1]} : vector<8x128xf32> to vector<8x32xf32>
    %96 = arith.mulf %93, %75 : vector<8x32xf32>
    %97 = arith.mulf %92, %95 : vector<8x32xf32>
    %98 = arith.addf %96, %97 : vector<8x32xf32>
    %99 = math.tanh %98 : vector<8x32xf32>
    %100 = arith.mulf %94, %99 : vector<8x32xf32>
    %c4_i32 = arith.constant 4 : i32
    %101 = arith.index_cast %c4_i32 : i32 to index
    %c0_24 = arith.constant 0 : index
    %c0_25 = arith.constant 0 : index
    %102 = vector.load %arg2[%101, %c0_24, %c0_25] : memref<8x8x16xbf16, #tpu.memory_space<vmem>>, vector<1x8x16xbf16>
    %103 = vector.shape_cast %102 : vector<1x8x16xbf16> to vector<8x16xbf16>
    %104 = arith.extf %103 : vector<8x16xbf16> to vector<8x16xf32>
    %105 = tpu.concatenate %104, %100 in 1 : vector<8x16xf32>, vector<8x32xf32> -> vector<8x48xf32>
    %106 = arith.truncf %105 : vector<8x48xf32> to vector<8x48xbf16>
    %cst_26 = arith.constant dense<0.000000e+00> : vector<8x128xf32>
    %107 = tpu.matmul %106, %3, %cst_26 {dimension_numbers = #tpu.dot_dimension_numbers<[1], [0], [0], [1], [0, 0, 1, 1], [], []>} : vector<8x48xbf16>, vector<48x128xbf16>, vector<8x128xf32> -> vector<8x128xf32>
    %108 = arith.addf %107, %6 : vector<8x128xf32>
    %109 = arith.negf %108 : vector<8x128xf32>
    %110 = math.exp %109 : vector<8x128xf32>
    %cst_27 = arith.constant 1.000000e+00 : f32
    %111 = vector.broadcast %cst_27 : f32 to vector<8x128xf32>
    %112 = arith.addf %111, %110 : vector<8x128xf32>
    %113 = arith.divf %111, %112 : vector<8x128xf32>
    %114 = math.tanh %108 : vector<8x128xf32>
    %115 = vector.extract_strided_slice %113 {offsets = [0, 0], sizes = [8, 32], strides = [1, 1]} : vector<8x128xf32> to vector<8x32xf32>
    %116 = vector.extract_strided_slice %113 {offsets = [0, 32], sizes = [8, 32], strides = [1, 1]} : vector<8x128xf32> to vector<8x32xf32>
    %117 = vector.extract_strided_slice %113 {offsets = [0, 96], sizes = [8, 32], strides = [1, 1]} : vector<8x128xf32> to vector<8x32xf32>
    %118 = vector.extract_strided_slice %114 {offsets = [0, 64], sizes = [8, 32], strides = [1, 1]} : vector<8x128xf32> to vector<8x32xf32>
    %119 = arith.mulf %116, %98 : vector<8x32xf32>
    %120 = arith.mulf %115, %118 : vector<8x32xf32>
    %121 = arith.addf %119, %120 : vector<8x32xf32>
    %122 = math.tanh %121 : vector<8x32xf32>
    %123 = arith.mulf %117, %122 : vector<8x32xf32>
    %c5_i32 = arith.constant 5 : i32
    %124 = arith.index_cast %c5_i32 : i32 to index
    %c0_28 = arith.constant 0 : index
    %c0_29 = arith.constant 0 : index
    %125 = vector.load %arg2[%124, %c0_28, %c0_29] : memref<8x8x16xbf16, #tpu.memory_space<vmem>>, vector<1x8x16xbf16>
    %126 = vector.shape_cast %125 : vector<1x8x16xbf16> to vector<8x16xbf16>
    %127 = arith.extf %126 : vector<8x16xbf16> to vector<8x16xf32>
    %128 = tpu.concatenate %127, %123 in 1 : vector<8x16xf32>, vector<8x32xf32> -> vector<8x48xf32>
    %129 = arith.truncf %128 : vector<8x48xf32> to vector<8x48xbf16>
    %cst_30 = arith.constant dense<0.000000e+00> : vector<8x128xf32>
    %130 = tpu.matmul %129, %3, %cst_30 {dimension_numbers = #tpu.dot_dimension_numbers<[1], [0], [0], [1], [0, 0, 1, 1], [], []>} : vector<8x48xbf16>, vector<48x128xbf16>, vector<8x128xf32> -> vector<8x128xf32>
    %131 = arith.addf %130, %6 : vector<8x128xf32>
    %132 = arith.negf %131 : vector<8x128xf32>
    %133 = math.exp %132 : vector<8x128xf32>
    %cst_31 = arith.constant 1.000000e+00 : f32
    %134 = vector.broadcast %cst_31 : f32 to vector<8x128xf32>
    %135 = arith.addf %134, %133 : vector<8x128xf32>
    %136 = arith.divf %134, %135 : vector<8x128xf32>
    %137 = math.tanh %131 : vector<8x128xf32>
    %138 = vector.extract_strided_slice %136 {offsets = [0, 0], sizes = [8, 32], strides = [1, 1]} : vector<8x128xf32> to vector<8x32xf32>
    %139 = vector.extract_strided_slice %136 {offsets = [0, 32], sizes = [8, 32], strides = [1, 1]} : vector<8x128xf32> to vector<8x32xf32>
    %140 = vector.extract_strided_slice %136 {offsets = [0, 96], sizes = [8, 32], strides = [1, 1]} : vector<8x128xf32> to vector<8x32xf32>
    %141 = vector.extract_strided_slice %137 {offsets = [0, 64], sizes = [8, 32], strides = [1, 1]} : vector<8x128xf32> to vector<8x32xf32>
    %142 = arith.mulf %139, %121 : vector<8x32xf32>
    %143 = arith.mulf %138, %141 : vector<8x32xf32>
    %144 = arith.addf %142, %143 : vector<8x32xf32>
    %145 = math.tanh %144 : vector<8x32xf32>
    %146 = arith.mulf %140, %145 : vector<8x32xf32>
    %c6_i32 = arith.constant 6 : i32
    %147 = arith.index_cast %c6_i32 : i32 to index
    %c0_32 = arith.constant 0 : index
    %c0_33 = arith.constant 0 : index
    %148 = vector.load %arg2[%147, %c0_32, %c0_33] : memref<8x8x16xbf16, #tpu.memory_space<vmem>>, vector<1x8x16xbf16>
    %149 = vector.shape_cast %148 : vector<1x8x16xbf16> to vector<8x16xbf16>
    %150 = arith.extf %149 : vector<8x16xbf16> to vector<8x16xf32>
    %151 = tpu.concatenate %150, %146 in 1 : vector<8x16xf32>, vector<8x32xf32> -> vector<8x48xf32>
    %152 = arith.truncf %151 : vector<8x48xf32> to vector<8x48xbf16>
    %cst_34 = arith.constant dense<0.000000e+00> : vector<8x128xf32>
    %153 = tpu.matmul %152, %3, %cst_34 {dimension_numbers = #tpu.dot_dimension_numbers<[1], [0], [0], [1], [0, 0, 1, 1], [], []>} : vector<8x48xbf16>, vector<48x128xbf16>, vector<8x128xf32> -> vector<8x128xf32>
    %154 = arith.addf %153, %6 : vector<8x128xf32>
    %155 = arith.negf %154 : vector<8x128xf32>
    %156 = math.exp %155 : vector<8x128xf32>
    %cst_35 = arith.constant 1.000000e+00 : f32
    %157 = vector.broadcast %cst_35 : f32 to vector<8x128xf32>
    %158 = arith.addf %157, %156 : vector<8x128xf32>
    %159 = arith.divf %157, %158 : vector<8x128xf32>
    %160 = math.tanh %154 : vector<8x128xf32>
    %161 = vector.extract_strided_slice %159 {offsets = [0, 0], sizes = [8, 32], strides = [1, 1]} : vector<8x128xf32> to vector<8x32xf32>
    %162 = vector.extract_strided_slice %159 {offsets = [0, 32], sizes = [8, 32], strides = [1, 1]} : vector<8x128xf32> to vector<8x32xf32>
    %163 = vector.extract_strided_slice %159 {offsets = [0, 96], sizes = [8, 32], strides = [1, 1]} : vector<8x128xf32> to vector<8x32xf32>
    %164 = vector.extract_strided_slice %160 {offsets = [0, 64], sizes = [8, 32], strides = [1, 1]} : vector<8x128xf32> to vector<8x32xf32>
    %165 = arith.mulf %162, %144 : vector<8x32xf32>
    %166 = arith.mulf %161, %164 : vector<8x32xf32>
    %167 = arith.addf %165, %166 : vector<8x32xf32>
    %168 = math.tanh %167 : vector<8x32xf32>
    %169 = arith.mulf %163, %168 : vector<8x32xf32>
    %c7_i32 = arith.constant 7 : i32
    %170 = arith.index_cast %c7_i32 : i32 to index
    %c0_36 = arith.constant 0 : index
    %c0_37 = arith.constant 0 : index
    %171 = vector.load %arg2[%170, %c0_36, %c0_37] : memref<8x8x16xbf16, #tpu.memory_space<vmem>>, vector<1x8x16xbf16>
    %172 = vector.shape_cast %171 : vector<1x8x16xbf16> to vector<8x16xbf16>
    %173 = arith.extf %172 : vector<8x16xbf16> to vector<8x16xf32>
    %174 = tpu.concatenate %173, %169 in 1 : vector<8x16xf32>, vector<8x32xf32> -> vector<8x48xf32>
    %175 = arith.truncf %174 : vector<8x48xf32> to vector<8x48xbf16>
    %cst_38 = arith.constant dense<0.000000e+00> : vector<8x128xf32>
    %176 = tpu.matmul %175, %3, %cst_38 {dimension_numbers = #tpu.dot_dimension_numbers<[1], [0], [0], [1], [0, 0, 1, 1], [], []>} : vector<8x48xbf16>, vector<48x128xbf16>, vector<8x128xf32> -> vector<8x128xf32>
    %177 = arith.addf %176, %6 : vector<8x128xf32>
    %178 = arith.negf %177 : vector<8x128xf32>
    %179 = math.exp %178 : vector<8x128xf32>
    %cst_39 = arith.constant 1.000000e+00 : f32
    %180 = vector.broadcast %cst_39 : f32 to vector<8x128xf32>
    %181 = arith.addf %180, %179 : vector<8x128xf32>
    %182 = arith.divf %180, %181 : vector<8x128xf32>
    %183 = math.tanh %177 : vector<8x128xf32>
    %184 = vector.extract_strided_slice %182 {offsets = [0, 0], sizes = [8, 32], strides = [1, 1]} : vector<8x128xf32> to vector<8x32xf32>
    %185 = vector.extract_strided_slice %182 {offsets = [0, 32], sizes = [8, 32], strides = [1, 1]} : vector<8x128xf32> to vector<8x32xf32>
    %186 = vector.extract_strided_slice %182 {offsets = [0, 96], sizes = [8, 32], strides = [1, 1]} : vector<8x128xf32> to vector<8x32xf32>
    %187 = vector.extract_strided_slice %183 {offsets = [0, 64], sizes = [8, 32], strides = [1, 1]} : vector<8x128xf32> to vector<8x32xf32>
    %188 = arith.mulf %185, %167 : vector<8x32xf32>
    %189 = arith.mulf %184, %187 : vector<8x32xf32>
    %190 = arith.addf %188, %189 : vector<8x32xf32>
    %191 = math.tanh %190 : vector<8x32xf32>
    %192 = arith.mulf %186, %191 : vector<8x32xf32>
    %c8_i32 = arith.constant 8 : i32
    %c0_40 = arith.constant 0 : index
    %c0_41 = arith.constant 0 : index
    %193 = vector.load %arg6[%c0_40, %c0_41] : memref<8x32xf32, #tpu.memory_space<vmem>>, vector<8x32xf32>
    tpu.vector_store %arg6[%c0_40, %c0_41], %192 {strides = array<i32>} : memref<8x32xf32, #tpu.memory_space<vmem>>, vector<8x32xf32>,
    %c0_42 = arith.constant 0 : index
    %c0_43 = arith.constant 0 : index
    %194 = vector.load %arg7[%c0_42, %c0_43] : memref<8x32xf32, #tpu.memory_space<vmem>>, vector<8x32xf32>
    tpu.vector_store %arg7[%c0_42, %c0_43], %190 {strides = array<i32>} : memref<8x32xf32, #tpu.memory_space<vmem>>, vector<8x32xf32>,
    %c0_i32_44 = arith.constant 0 : i32
    %195 = arith.cmpi eq, %arg1, %c0_i32_44 : i32
    %196 = arith.extui %195 : i1 to i32
    %c0_i32_45 = arith.constant 0 : i32
    %197 = arith.cmpi ne, %196, %c0_i32_45 : i32
    scf.if %197 {
      %c0_46 = arith.constant 0 : index
      %c0_47 = arith.constant 0 : index
      %198 = vector.load %arg5[%c0_46, %c0_47] : memref<8x32xf32, #tpu.memory_space<vmem>>, vector<8x32xf32>
      tpu.vector_store %arg5[%c0_46, %c0_47], %192 {strides = array<i32>} : memref<8x32xf32, #tpu.memory_space<vmem>>, vector<8x32xf32>,
    } else {
    }
    return
  }
  func.func @transform_0(%arg0: i32, %arg1: i32) -> (i32, i32, i32) {
    %c0_i32 = arith.constant 0 : i32
    %c0_i32_0 = arith.constant 0 : i32
    return %arg1, %arg0, %c0_i32 : i32, i32, i32
  }
  func.func @transform_1(%arg0: i32, %arg1: i32) -> (i32, i32) {
    %c0_i32 = arith.constant 0 : i32
    %c0_i32_0 = arith.constant 0 : i32
    %c0_i32_1 = arith.constant 0 : i32
    return %c0_i32, %c0_i32_0 : i32, i32
  }
  func.func @transform_2(%arg0: i32, %arg1: i32) -> (i32, i32) {
    %c0_i32 = arith.constant 0 : i32
    %c0_i32_0 = arith.constant 0 : i32
    %c0_i32_1 = arith.constant 0 : i32
    return %c0_i32, %c0_i32_0 : i32, i32
  }
  func.func @transform_3(%arg0: i32, %arg1: i32) -> (i32, i32) {
    %c0_i32 = arith.constant 0 : i32
    %c0_i32_0 = arith.constant 0 : i32
    return %arg0, %c0_i32 : i32, i32
  }
}

</mosaic_0001>

<llo_original>
// kernel: tpu_custom_call.1
$region0: #{tpu_custom_call.1}
  #allocation0 [shape = 'u32[]', space=smem, size = 0x4, offset = 0x4, fixed_abs, tag = 'smem constant byte address 0x4 - core index']
  #allocation1 [shape = 'u32[72,128]{1,0:T(1,128)}', space=vmem, size = 0x9000, scoped, tag = 'internal scratch']
  #allocation2 [shape = 'f32[8,32]{1,0:T(8,128)}', space=vmem, size = 0x1000, scoped, tag = 'scratch operand']
  #allocation3 [shape = 'f32[8,32]{1,0:T(8,128)}', space=vmem, size = 0x1000, scoped, tag = 'scratch operand']
  %s0 = inlined_call_operand.hbm [shape: bf16[8,8,16], index: 0, kind: input, shape index: {}]
  %s1 = inlined_call_operand.hbm [shape: bf16[48,128], index: 1, kind: input, shape index: {}]
  %s2 = inlined_call_operand.vmem [shape: f32[1,128], index: 2, kind: input, shape index: {}]
  %s3 = inlined_call_operand.hbm [shape: f32[8,32], index: 3, kind: output, shape index: {}]
  %s4 = sld [smem:[#allocation0]]
  $region38: #{tpu_custom_call.1} parent=0
    _
  %s6 = ssub.s32 1, %s4
  %s7 = scalar_select 0, %s6, %s4
  $region1: #{tpu_custom_call.1} parent=0
    #allocation4 [shape = 'u8[16384]{0}', space=vmem, size = 0x4000, scoped, tag = 'input window, operand 0, single buffered']
    #allocation5 [shape = 's32[1]{0}', space=sflag, size = 0x4, scoped, tag = 'scoped memory for tpu_custom_call.1']
    #allocation6 [shape = 's32[1]{0}', space=sflag, size = 0x4, scoped, tag = 'scoped memory for tpu_custom_call.1']
    #allocation7 [shape = 'u8[12288]{0}', space=vmem, size = 0x3000, scoped, tag = 'input window, operand 1, single buffered']
    #allocation8 [shape = 's32[1]{0}', space=sflag, size = 0x4, scoped, tag = 'scoped memory for tpu_custom_call.1']
    #allocation9 [shape = 'u8[4096]{0}', space=vmem, size = 0x1000, scoped, tag = 'output window, operand 0, single buffered']
    %8 = vsyncpa [#allocation5], 0
    %9 = vsyncpa [#allocation8], 0
    %10 = vsyncpa [#allocation6], 0
    // Predicated region
    $region2: #{tpu_custom_call.1} parent=1 // pred_check
      _
    $region3: #{tpu_custom_call.1} parent=1 // pred_check_branch
      %12 = sbr.rel (0) target = $region5
    $region4: #{tpu_custom_call.1} parent=1 // pred_region
      %14 = vsyncadd [#allocation5], 0
      %s15 = sshll.u32 %s0, 4
      %s16 = int_to_ptr.hbm [resolvable:$true] %s15
      %s17 = sshll.u32 [#allocation4], 4
      %s18 = int_to_ptr.vmem [resolvable:$true] %s17
      %23 = dma.hbm_to_vmem [thread:$0]  %s16, 512, %s18, [#allocation5], 64, 64, 4
    $region5: #{tpu_custom_call.1} parent=1 // pred_fallthru
      _
    // Predicated region
    $region6: #{tpu_custom_call.1} parent=1 // pred_check
      _
    $region7: #{tpu_custom_call.1} parent=1 // pred_check_branch
      %25 = sbr.rel (0) target = $region9
    $region8: #{tpu_custom_call.1} parent=1 // pred_region
      %27 = vsyncadd [#allocation8], 0
      %s28 = sshll.u32 %s1, 4
      %s29 = int_to_ptr.hbm [resolvable:$true] %s28
      %s30 = sshll.u32 [#allocation7], 4
      %s31 = int_to_ptr.vmem [resolvable:$true] %s30
      %36 = dma.hbm_to_vmem [thread:$0]  %s29, 384, %s31, [#allocation8], 64, 64, 4
    $region9: #{tpu_custom_call.1} parent=1 // pred_fallthru
      _
    // Predicated region
    $region10: #{tpu_custom_call.1} parent=1 // pred_check
      _
    $region11: #{tpu_custom_call.1} parent=1 // pred_check_branch
      %38 = sbr.rel (0) target = $region13
    $region12: #{tpu_custom_call.1} parent=1 // pred_region
      _
    $region13: #{tpu_custom_call.1} parent=1 // pred_fallthru
      _
    // Predicated region
    $region14: #{tpu_custom_call.1} parent=1 // pred_check
      _
    $region15: #{tpu_custom_call.1} parent=1 // pred_check_branch
      %40 = sbr.rel (0) target = $region17
    $region16: #{tpu_custom_call.1} parent=1 // pred_region
      %42 = dma.done [#allocation5], 512
    $region17: #{tpu_custom_call.1} parent=1 // pred_fallthru
      _
    // Predicated region
    $region18: #{tpu_custom_call.1} parent=1 // pred_check
      _
    $region19: #{tpu_custom_call.1} parent=1 // pred_check_branch
      %44 = sbr.rel (0) target = $region21
    $region20: #{tpu_custom_call.1} parent=1 // pred_region
      %46 = dma.done [#allocation8], 384
    $region21: #{tpu_custom_call.1} parent=1 // pred_fallthru
      _
    %p48 = scmp.eq.s32.totalorder 0, 0
    // Predicated region
    $region22: #{tpu_custom_call.1} parent=1 // pred_check
      %p49 = pneg %p48
    $region23: #{tpu_custom_call.1} parent=1 // pred_check_branch
      %51 = sbr.rel (%p49) target = $region25
    $region24: #{tpu_custom_call.1} parent=1 // pred_region
      %vm52 = vcmask 261120
      %53 = vst.msk [vmem:[#allocation2] sm:$0xff] %vm52, 0.0
      %54 = vst.msk [vmem:[#allocation3] sm:$0xff] %vm52, 0.0
    $region25: #{tpu_custom_call.1} parent=1 // pred_fallthru
      _
    %v55 = vld [vmem:[#allocation7] sm:$0xf]
    %v56 = vld [vmem:[#allocation7 + $0x4] sm:$0xf]
    %v57 = vld [vmem:[#allocation7 + $0x8] sm:$0xf]
    %v58 = vld [vmem:[#allocation7 + $0xc] sm:$0xf]
    %v59 = vld [vmem:[#allocation7 + $0x10] sm:$0xf]
    %v60 = vld [vmem:[#allocation7 + $0x14] sm:$0xf]
    %v61 = vld [vmem:[%s2] sm:$0x1]
    %v63 = vperm.slane %v61, 0
    %v65 = vld [vmem:[#allocation2] sm:$0xff]
    %v66 = vld [vmem:[#allocation3] sm:$0xff]
    %v67 = vld [vmem:[#allocation4] sm:$0xf]
    %v68 = vunpack.c.l.bf16 %v67
    %70 = vrot.lane.b32.xlu0 %v65, 16
    %v71 = vpop.permute.xlu0 %70
    %vm73 = vcmask 130048
    %v74 = vsel %vm73, %v68, %v71
    %v75 = vpack.c.bf16 %v74, %v74
    %v82 = vunpack.c.l.b16 %v55
    %v83 = vunpack.c.l.b16 %v56
    %v84 = vunpack.c.l.b16 %v57
    %v85 = vunpack.c.l.b16 %v58
    %v86 = vunpack.c.l.b16 %v59
    %v87 = vunpack.c.l.b16 %v60
    %v88 = vpack.c.b16 %v83, %v82
    %v89 = vpack.c.b16 %v85, %v84
    %v90 = vpack.c.b16 %v87, %v86
    %vm94 = vcmask 392192
    %v96 = vsel %vm94, %v75, 0
    %98 = vmatpush.bf16.msra.mxu0 0
    %99 = vmatpush.bf16.msra.mxu0 0
    %100 = vmatpush.bf16.msra.mxu0 0
    %101 = vmatpush.bf16.msra.mxu0 0
    %102 = vmatpush.bf16.msra.mxu0 0
    %103 = vmatpush.bf16.msra.mxu0 %v90
    %104 = vmatpush.bf16.msra.mxu0 %v89
    %105 = vmatpush.bf16.msra.mxu0 %v88
    %106 = vmatmul.bf16.gmra.mxu0 %v96
    %v107 = vpop.f32.mrf.mxu0
    %v108 = vadd.f32 %v63, %v107
    %v109 = vpop.f32.mrf.mxu0
    %110 = vdwg.mxu0
    %v111 = vxor.u32 %v108, 2147483648
    %v112 = vmul.f32 %v111, 1.442695
    %v113 = vpow.pop %v112
    %v114 = vadd.f32 %v113, 1.0
    %v115 = vrcp.pop %v114
    %v116 = vmul.f32 %v114, %v115
    %v117 = vsub.f32 1.0, %v116
    %v118 = vmul.f32 %v115, %v117
    %v119 = vadd.f32 %v115, %v118
    %vm120 = vweird.f32 %v114
    %vm121 = vweird.f32 %v115
    %vm122 = vmor %vm120, %vm121
    %v123 = vsel %vm122, %v115, %v119
    %v124 = vand.u32 2147483647, %v114
    %vm125 = vcmp.eq.f32.partialorder %v124, 8.507059e+37
    %v126 = vand.u32 %v114, 2147483648
    %v127 = vor.u32 1.1754944e-38, %v126
    %v128 = vsel %vm125, %v127, %v123
    %v129 = vmul.f32 1.0, %v128
    %v130 = vtanh.pop %v108
    %132 = vrot.lane.b32.xlu0 %v66, 32
    %v133 = vpop.permute.xlu0 %132
    %v135 = vmul.f32 %v129, %v133
    %137 = vrot.lane.b32.xlu0 %v130, 64
    %v138 = vpop.permute.xlu0 %137
    %v140 = vmul.f32 %v129, %v138
    %142 = vrot.lane.b32.xlu0 %v140, 32
    %v143 = vpop.permute.xlu0 %142
    %v145 = vadd.f32 %v135, %v143
    %v146 = vtanh.pop %v145
    %148 = vrot.lane.b32.xlu0 %v146, 64
    %v149 = vpop.permute.xlu0 %148
    %v151 = vmul.f32 %v129, %v149
    %s152 = scalar_lea.vmem [#allocation4], 4
    %v153 = vld [vmem:[%s152] sm:$0xf]
    %v154 = vunpack.c.l.bf16 %v153
    %156 = vrot.lane.b32.xlu0 %v151, 48
    %v157 = vpop.permute.xlu0 %156
    %v159 = vsel %vm73, %v154, %v157
    %v160 = vpack.c.bf16 %v159, %v159
    %v162 = vsel %vm94, %v160, 0
    %164 = vmatpush.bf16.msra.mxu0 0
    %165 = vmatpush.bf16.msra.mxu0 0
    %166 = vmatpush.bf16.msra.mxu0 0
    %167 = vmatpush.bf16.msra.mxu0 0
    %168 = vmatpush.bf16.msra.mxu0 0
    %169 = vmatpush.bf16.msra.mxu0 %v90
    %170 = vmatpush.bf16.msra.mxu0 %v89
    %171 = vmatpush.bf16.msra.mxu0 %v88
    %172 = vmatmul.bf16.gmra.mxu0 %v162
    %v173 = vpop.f32.mrf.mxu0
    %v174 = vadd.f32 %v63, %v173
    %v175 = vpop.f32.mrf.mxu0
    %176 = vdwg.mxu0
    %v177 = vxor.u32 %v174, 2147483648
    %v178 = vmul.f32 %v177, 1.442695
    %v179 = vpow.pop %v178
    %v180 = vadd.f32 %v179, 1.0
    %v181 = vrcp.pop %v180
    %v182 = vmul.f32 %v180, %v181
    %v183 = vsub.f32 1.0, %v182
    %v184 = vmul.f32 %v181, %v183
    %v185 = vadd.f32 %v181, %v184
    %vm186 = vweird.f32 %v180
    %vm187 = vweird.f32 %v181
    %vm188 = vmor %vm186, %vm187
    %v189 = vsel %vm188, %v181, %v185
    %v190 = vand.u32 2147483647, %v180
    %vm191 = vcmp.eq.f32.partialorder %v190, 8.507059e+37
    %v192 = vand.u32 %v180, 2147483648
    %v193 = vor.u32 1.1754944e-38, %v192
    %v194 = vsel %vm191, %v193, %v189
    %v195 = vmul.f32 1.0, %v194
    %v196 = vtanh.pop %v174
    %v197 = vmul.f32 %v195, %v145
    %199 = vrot.lane.b32.xlu0 %v196, 64
    %v200 = vpop.permute.xlu0 %199
    %v202 = vmul.f32 %v195, %v200
    %204 = vrot.lane.b32.xlu0 %v202, 32
    %v205 = vpop.permute.xlu0 %204
    %v207 = vadd.f32 %v197, %v205
    %v208 = vtanh.pop %v207
    %210 = vrot.lane.b32.xlu0 %v208, 64
    %v211 = vpop.permute.xlu0 %210
    %v213 = vmul.f32 %v195, %v211
    %s214 = scalar_lea.vmem [#allocation4], 8
    %v215 = vld [vmem:[%s214] sm:$0xf]
    %v216 = vunpack.c.l.bf16 %v215
    %218 = vrot.lane.b32.xlu0 %v213, 48
    %v219 = vpop.permute.xlu0 %218
    %v221 = vsel %vm73, %v216, %v219
    %v222 = vpack.c.bf16 %v221, %v221
    %v224 = vsel %vm94, %v222, 0
    %226 = vmatpush.bf16.msra.mxu0 0
    %227 = vmatpush.bf16.msra.mxu0 0
    %228 = vmatpush.bf16.msra.mxu0 0
    %229 = vmatpush.bf16.msra.mxu0 0
    %230 = vmatpush.bf16.msra.mxu0 0
    %231 = vmatpush.bf16.msra.mxu0 %v90
    %232 = vmatpush.bf16.msra.mxu0 %v89
    %233 = vmatpush.bf16.msra.mxu0 %v88
    %234 = vmatmul.bf16.gmra.mxu0 %v224
    %v235 = vpop.f32.mrf.mxu0
    %v236 = vadd.f32 %v63, %v235
    %v237 = vpop.f32.mrf.mxu0
    %238 = vdwg.mxu0
    %v239 = vxor.u32 %v236, 2147483648
    %v240 = vmul.f32 %v239, 1.442695
    %v241 = vpow.pop %v240
    %v242 = vadd.f32 %v241, 1.0
    %v243 = vrcp.pop %v242
    %v244 = vmul.f32 %v242, %v243
    %v245 = vsub.f32 1.0, %v244
    %v246 = vmul.f32 %v243, %v245
    %v247 = vadd.f32 %v243, %v246
    %vm248 = vweird.f32 %v242
    %vm249 = vweird.f32 %v243
    %vm250 = vmor %vm248, %vm249
    %v251 = vsel %vm250, %v243, %v247
    %v252 = vand.u32 2147483647, %v242
    %vm253 = vcmp.eq.f32.partialorder %v252, 8.507059e+37
    %v254 = vand.u32 %v242, 2147483648
    %v255 = vor.u32 1.1754944e-38, %v254
    %v256 = vsel %vm253, %v255, %v251
    %v257 = vmul.f32 1.0, %v256
    %v258 = vtanh.pop %v236
    %v259 = vmul.f32 %v257, %v207
    %261 = vrot.lane.b32.xlu0 %v258, 64
    %v262 = vpop.permute.xlu0 %261
    %v264 = vmul.f32 %v257, %v262
    %266 = vrot.lane.b32.xlu0 %v264, 32
    %v267 = vpop.permute.xlu0 %266
    %v269 = vadd.f32 %v259, %v267
    %v270 = vtanh.pop %v269
    %272 = vrot.lane.b32.xlu0 %v270, 64
    %v273 = vpop.permute.xlu0 %272
    %v275 = vmul.f32 %v257, %v273
    %s276 = scalar_lea.vmem [#allocation4], 12
    %v277 = vld [vmem:[%s276] sm:$0xf]
    %v278 = vunpack.c.l.bf16 %v277
    %280 = vrot.lane.b32.xlu0 %v275, 48
    %v281 = vpop.permute.xlu0 %280
    %v283 = vsel %vm73, %v278, %v281
    %v284 = vpack.c.bf16 %v283, %v283
    %v286 = vsel %vm94, %v284, 0
    %288 = vmatpush.bf16.msra.mxu0 0
    %289 = vmatpush.bf16.msra.mxu0 0
    %290 = vmatpush.bf16.msra.mxu0 0
    %291 = vmatpush.bf16.msra.mxu0 0
    %292 = vmatpush.bf16.msra.mxu0 0
    %293 = vmatpush.bf16.msra.mxu0 %v90
    %294 = vmatpush.bf16.msra.mxu0 %v89
    %295 = vmatpush.bf16.msra.mxu0 %v88
    %296 = vmatmul.bf16.gmra.mxu0 %v286
    %v297 = vpop.f32.mrf.mxu0
    %v298 = vadd.f32 %v63, %v297
    %v299 = vpop.f32.mrf.mxu0
    %300 = vdwg.mxu0
    %v301 = vxor.u32 %v298, 2147483648
    %v302 = vmul.f32 %v301, 1.442695
    %v303 = vpow.pop %v302
    %v304 = vadd.f32 %v303, 1.0
    %v305 = vrcp.pop %v304
    %v306 = vmul.f32 %v304, %v305
    %v307 = vsub.f32 1.0, %v306
    %v308 = vmul.f32 %v305, %v307
    %v309 = vadd.f32 %v305, %v308
    %vm310 = vweird.f32 %v304
    %vm311 = vweird.f32 %v305
    %vm312 = vmor %vm310, %vm311
    %v313 = vsel %vm312, %v305, %v309
    %v314 = vand.u32 2147483647, %v304
    %vm315 = vcmp.eq.f32.partialorder %v314, 8.507059e+37
    %v316 = vand.u32 %v304, 2147483648
    %v317 = vor.u32 1.1754944e-38, %v316
    %v318 = vsel %vm315, %v317, %v313
    %v319 = vmul.f32 1.0, %v318
    %v320 = vtanh.pop %v298
    %v321 = vmul.f32 %v319, %v269
    %323 = vrot.lane.b32.xlu0 %v320, 64
    %v324 = vpop.permute.xlu0 %323
    %v326 = vmul.f32 %v319, %v324
    %328 = vrot.lane.b32.xlu0 %v326, 32
    %v329 = vpop.permute.xlu0 %328
    %v331 = vadd.f32 %v321, %v329
    %v332 = vtanh.pop %v331
    %334 = vrot.lane.b32.xlu0 %v332, 64
    %v335 = vpop.permute.xlu0 %334
    %v337 = vmul.f32 %v319, %v335
    %s338 = scalar_lea.vmem [#allocation4], 16
    %v339 = vld [vmem:[%s338] sm:$0xf]
    %v340 = vunpack.c.l.bf16 %v339
    %342 = vrot.lane.b32.xlu0 %v337, 48
    %v343 = vpop.permute.xlu0 %342
    %v345 = vsel %vm73, %v340, %v343
    %v346 = vpack.c.bf16 %v345, %v345
    %v348 = vsel %vm94, %v346, 0
    %350 = vmatpush.bf16.msra.mxu0 0
    %351 = vmatpush.bf16.msra.mxu0 0
    %352 = vmatpush.bf16.msra.mxu0 0
    %353 = vmatpush.bf16.msra.mxu0 0
    %354 = vmatpush.bf16.msra.mxu0 0
    %355 = vmatpush.bf16.msra.mxu0 %v90
    %356 = vmatpush.bf16.msra.mxu0 %v89
    %357 = vmatpush.bf16.msra.mxu0 %v88
    %358 = vmatmul.bf16.gmra.mxu0 %v348
    %v359 = vpop.f32.mrf.mxu0
    %v360 = vadd.f32 %v63, %v359
    %v361 = vpop.f32.mrf.mxu0
    %362 = vdwg.mxu0
    %v363 = vxor.u32 %v360, 2147483648
    %v364 = vmul.f32 %v363, 1.442695
    %v365 = vpow.pop %v364
    %v366 = vadd.f32 %v365, 1.0
    %v367 = vrcp.pop %v366
    %v368 = vmul.f32 %v366, %v367
    %v369 = vsub.f32 1.0, %v368
    %v370 = vmul.f32 %v367, %v369
    %v371 = vadd.f32 %v367, %v370
    %vm372 = vweird.f32 %v366
    %vm373 = vweird.f32 %v367
    %vm374 = vmor %vm372, %vm373
    %v375 = vsel %vm374, %v367, %v371
    %v376 = vand.u32 2147483647, %v366
    %vm377 = vcmp.eq.f32.partialorder %v376, 8.507059e+37
    %v378 = vand.u32 %v366, 2147483648
    %v379 = vor.u32 1.1754944e-38, %v378
    %v380 = vsel %vm377, %v379, %v375
    %v381 = vmul.f32 1.0, %v380
    %v382 = vtanh.pop %v360
    %v383 = vmul.f32 %v381, %v331
    %385 = vrot.lane.b32.xlu0 %v382, 64
    %v386 = vpop.permute.xlu0 %385
    %v388 = vmul.f32 %v381, %v386
    %390 = vrot.lane.b32.xlu0 %v388, 32
    %v391 = vpop.permute.xlu0 %390
    %v393 = vadd.f32 %v383, %v391
    %v394 = vtanh.pop %v393
    %396 = vrot.lane.b32.xlu0 %v394, 64
    %v397 = vpop.permute.xlu0 %396
    %v399 = vmul.f32 %v381, %v397
    %s400 = scalar_lea.vmem [#allocation4], 20
    %v401 = vld [vmem:[%s400] sm:$0xf]
    %v402 = vunpack.c.l.bf16 %v401
    %404 = vrot.lane.b32.xlu0 %v399, 48
    %v405 = vpop.permute.xlu0 %404
    %v407 = vsel %vm73, %v402, %v405
    %v408 = vpack.c.bf16 %v407, %v407
    %v410 = vsel %vm94, %v408, 0
    %412 = vmatpush.bf16.msra.mxu0 0
    %413 = vmatpush.bf16.msra.mxu0 0
    %414 = vmatpush.bf16.msra.mxu0 0
    %415 = vmatpush.bf16.msra.mxu0 0
    %416 = vmatpush.bf16.msra.mxu0 0
    %417 = vmatpush.bf16.msra.mxu0 %v90
    %418 = vmatpush.bf16.msra.mxu0 %v89
    %419 = vmatpush.bf16.msra.mxu0 %v88
    %420 = vmatmul.bf16.gmra.mxu0 %v410
    %v421 = vpop.f32.mrf.mxu0
    %v422 = vadd.f32 %v63, %v421
    %v423 = vpop.f32.mrf.mxu0
    %424 = vdwg.mxu0
    %v425 = vxor.u32 %v422, 2147483648
    %v426 = vmul.f32 %v425, 1.442695
    %v427 = vpow.pop %v426
    %v428 = vadd.f32 %v427, 1.0
    %v429 = vrcp.pop %v428
    %v430 = vmul.f32 %v428, %v429
    %v431 = vsub.f32 1.0, %v430
    %v432 = vmul.f32 %v429, %v431
    %v433 = vadd.f32 %v429, %v432
    %vm434 = vweird.f32 %v428
    %vm435 = vweird.f32 %v429
    %vm436 = vmor %vm434, %vm435
    %v437 = vsel %vm436, %v429, %v433
    %v438 = vand.u32 2147483647, %v428
    %vm439 = vcmp.eq.f32.partialorder %v438, 8.507059e+37
    %v440 = vand.u32 %v428, 2147483648
    %v441 = vor.u32 1.1754944e-38, %v440
    %v442 = vsel %vm439, %v441, %v437
    %v443 = vmul.f32 1.0, %v442
    %v444 = vtanh.pop %v422
    %v445 = vmul.f32 %v443, %v393
    %447 = vrot.lane.b32.xlu0 %v444, 64
    %v448 = vpop.permute.xlu0 %447
    %v450 = vmul.f32 %v443, %v448
    %452 = vrot.lane.b32.xlu0 %v450, 32
    %v453 = vpop.permute.xlu0 %452
    %v455 = vadd.f32 %v445, %v453
    %v456 = vtanh.pop %v455
    %458 = vrot.lane.b32.xlu0 %v456, 64
    %v459 = vpop.permute.xlu0 %458
    %v461 = vmul.f32 %v443, %v459
    %s462 = scalar_lea.vmem [#allocation4], 24
    %v463 = vld [vmem:[%s462] sm:$0xf]
    %v464 = vunpack.c.l.bf16 %v463
    %466 = vrot.lane.b32.xlu0 %v461, 48
    %v467 = vpop.permute.xlu0 %466
    %v469 = vsel %vm73, %v464, %v467
    %v470 = vpack.c.bf16 %v469, %v469
    %v472 = vsel %vm94, %v470, 0
    %474 = vmatpush.bf16.msra.mxu0 0
    %475 = vmatpush.bf16.msra.mxu0 0
    %476 = vmatpush.bf16.msra.mxu0 0
    %477 = vmatpush.bf16.msra.mxu0 0
    %478 = vmatpush.bf16.msra.mxu0 0
    %479 = vmatpush.bf16.msra.mxu0 %v90
    %480 = vmatpush.bf16.msra.mxu0 %v89
    %481 = vmatpush.bf16.msra.mxu0 %v88
    %482 = vmatmul.bf16.gmra.mxu0 %v472
    %v483 = vpop.f32.mrf.mxu0
    %v484 = vadd.f32 %v63, %v483
    %v485 = vpop.f32.mrf.mxu0
    %486 = vdwg.mxu0
    %v487 = vxor.u32 %v484, 2147483648
    %v488 = vmul.f32 %v487, 1.442695
    %v489 = vpow.pop %v488
    %v490 = vadd.f32 %v489, 1.0
    %v491 = vrcp.pop %v490
    %v492 = vmul.f32 %v490, %v491
    %v493 = vsub.f32 1.0, %v492
    %v494 = vmul.f32 %v491, %v493
    %v495 = vadd.f32 %v491, %v494
    %vm496 = vweird.f32 %v490
    %vm497 = vweird.f32 %v491
    %vm498 = vmor %vm496, %vm497
    %v499 = vsel %vm498, %v491, %v495
    %v500 = vand.u32 2147483647, %v490
    %vm501 = vcmp.eq.f32.partialorder %v500, 8.507059e+37
    %v502 = vand.u32 %v490, 2147483648
    %v503 = vor.u32 1.1754944e-38, %v502
    %v504 = vsel %vm501, %v503, %v499
    %v505 = vmul.f32 1.0, %v504
    %v506 = vtanh.pop %v484
    %v507 = vmul.f32 %v505, %v455
    %509 = vrot.lane.b32.xlu0 %v506, 64
    %v510 = vpop.permute.xlu0 %509
    %v512 = vmul.f32 %v505, %v510
    %514 = vrot.lane.b32.xlu0 %v512, 32
    %v515 = vpop.permute.xlu0 %514
    %v517 = vadd.f32 %v507, %v515
    %v518 = vtanh.pop %v517
    %520 = vrot.lane.b32.xlu0 %v518, 64
    %v521 = vpop.permute.xlu0 %520
    %v523 = vmul.f32 %v505, %v521
    %s524 = scalar_lea.vmem [#allocation4], 28
    %v525 = vld [vmem:[%s524] sm:$0xf]
    %v526 = vunpack.c.l.bf16 %v525
    %528 = vrot.lane.b32.xlu0 %v523, 48
    %v529 = vpop.permute.xlu0 %528
    %v531 = vsel %vm73, %v526, %v529
    %v532 = vpack.c.bf16 %v531, %v531
    %v534 = vsel %vm94, %v532, 0
    %536 = vmatpush.bf16.msra.mxu0 0
    %537 = vmatpush.bf16.msra.mxu0 0
    %538 = vmatpush.bf16.msra.mxu0 0
    %539 = vmatpush.bf16.msra.mxu0 0
    %540 = vmatpush.bf16.msra.mxu0 0
    %541 = vmatpush.bf16.msra.mxu0 %v90
    %542 = vmatpush.bf16.msra.mxu0 %v89
    %543 = vmatpush.bf16.msra.mxu0 %v88
    %544 = vmatmul.bf16.gmra.mxu0 %v534
    %v545 = vpop.f32.mrf.mxu0
    %v546 = vadd.f32 %v63, %v545
    %v547 = vpop.f32.mrf.mxu0
    %548 = vdwg.mxu0
    %v549 = vxor.u32 %v546, 2147483648
    %v550 = vmul.f32 %v549, 1.442695
    %v551 = vpow.pop %v550
    %v552 = vadd.f32 %v551, 1.0
    %v553 = vrcp.pop %v552
    %v554 = vmul.f32 %v552, %v553
    %v555 = vsub.f32 1.0, %v554
    %v556 = vmul.f32 %v553, %v555
    %v557 = vadd.f32 %v553, %v556
    %vm558 = vweird.f32 %v552
    %vm559 = vweird.f32 %v553
    %vm560 = vmor %vm558, %vm559
    %v561 = vsel %vm560, %v553, %v557
    %v562 = vand.u32 2147483647, %v552
    %vm563 = vcmp.eq.f32.partialorder %v562, 8.507059e+37
    %v564 = vand.u32 %v552, 2147483648
    %v565 = vor.u32 1.1754944e-38, %v564
    %v566 = vsel %vm563, %v565, %v561
    %v567 = vmul.f32 1.0, %v566
    %v568 = vtanh.pop %v546
    %v569 = vmul.f32 %v567, %v517
    %571 = vrot.lane.b32.xlu0 %v568, 64
    %v572 = vpop.permute.xlu0 %571
    %v574 = vmul.f32 %v567, %v572
    %576 = vrot.lane.b32.xlu0 %v574, 32
    %v577 = vpop.permute.xlu0 %576
    %v579 = vadd.f32 %v569, %v577
    %v580 = vtanh.pop %v579
    %582 = vrot.lane.b32.xlu0 %v580, 64
    %v583 = vpop.permute.xlu0 %582
    %v585 = vmul.f32 %v567, %v583
    %587 = vrot.lane.b32.xlu0 %v585, 32
    %v588 = vpop.permute.xlu0 %587
    %vm590 = vcmask 261120
    %591 = vst.msk [vmem:[#allocation2] sm:$0xff] %vm590, %v588
    %593 = vrot.lane.b32.xlu0 %v579, 96
    %v594 = vpop.permute.xlu0 %593
    %596 = vst.msk [vmem:[#allocation3] sm:$0xff] %vm590, %v594
    // Predicated region
    $region26: #{tpu_custom_call.1} parent=1 // pred_check
      %p597 = pneg %p48
    $region27: #{tpu_custom_call.1} parent=1 // pred_check_branch
      %599 = sbr.rel (%p597) target = $region29
    $region28: #{tpu_custom_call.1} parent=1 // pred_region
      %600 = vst.msk [vmem:[#allocation9] sm:$0xff] %vm590, %v588
    $region29: #{tpu_custom_call.1} parent=1 // pred_fallthru
      _
    // Predicated region
    $region30: #{tpu_custom_call.1} parent=1 // pred_check
      _
    $region31: #{tpu_custom_call.1} parent=1 // pred_check_branch
      %602 = sbr.rel (0) target = $region33
    $region32: #{tpu_custom_call.1} parent=1 // pred_region
      %604 = vsyncadd [#allocation6], 0
      %s606 = sshll.u32 [#allocation9], 4
      %s607 = int_to_ptr.vmem [resolvable:$true] %s606
      %s608 = sshll.u32 %s3, 4
      %s609 = int_to_ptr.hbm [resolvable:$true] %s608
      %611 = dma.vmem_to_hbm [thread:$0]  %s607, 128, %s609, [#allocation6]
    $region33: #{tpu_custom_call.1} parent=1 // pred_fallthru
      _
    // Predicated region
    $region34: #{tpu_custom_call.1} parent=1 // pred_check
      _
    $region35: #{tpu_custom_call.1} parent=1 // pred_check_branch
      %613 = sbr.rel (0) target = $region37
    $region36: #{tpu_custom_call.1} parent=1 // pred_region
      %615 = dma.done [#allocation6], 128
    $region37: #{tpu_custom_call.1} parent=1 // pred_fallthru
      _
    %616 = vsyncpa [#allocation5], 1
    %617 = vsyncpa [#allocation8], 1
    %618 = vsyncpa [#allocation6], 1

</llo_original>
